<compile_context>
chip_gen: v7x
topology: tpu7x:2x2x1
jax: 0.10.0
libtpu: 0.0.40
codegen_flags: <defaults>
</compile_context>

<pallas_src>
import jax
import jax.numpy as jnp
from jax.experimental import pallas as pl
from jax.experimental.pallas import tpu as pltpu


def _decoder_step_kernel(tok_ref,           # SMEM  [B]        int32 token ids
                         emb_ref,           # VMEM  [V, E]     embedding table
                         h_ref,             # VMEM  [B, H]     previous hidden
                         c_ref,             # VMEM  [B, H]     previous cell
                         w_gates_ref,       # VMEM  [E+H, 4H]  stacked [W_ih^T ; W_hh^T]
                         b_gates_ref,       # VMEM  [1, 4H]    b_ih + b_hh
                         w_out_ref,         # VMEM  [H, O]     fc_out weight^T
                         b_out_ref,         # VMEM  [1, O]     fc_out bias
                         pred_ref,          # out   [B, O]
                         h_out_ref,         # out   [B, H]   (aliased with h_ref's HBM buffer)
                         c_out_ref,         # out   [B, H]   (aliased with c_ref's HBM buffer)
                         xh_ref):           # scratch VMEM [B, E+H]
    B, H = h_ref.shape
    E = emb_ref.shape[1]

    # --- embedding gather + concat([x, h]) built directly in VMEM scratch ----
    # TODO(synk): nn.Dropout(0.5) on the embedded input is stochastic in training
    # mode; implemented as identity (eval-mode) for determinism.
    for b in range(B):                       # B is small & static -> unrolled
        tok = tok_ref[b]                     # scalar read from SMEM
        xh_ref[pl.ds(b, 1), pl.ds(0, E)] = emb_ref[pl.ds(tok, 1), :]
    xh_ref[:, pl.ds(E, H)] = h_ref[...]

    xh = xh_ref[...]                         # [B, E+H]

    # --- all four LSTM gates with a single MXU matmul -------------------------
    gates = (jnp.dot(xh, w_gates_ref[...], preferred_element_type=jnp.float32)
             + b_gates_ref[...])             # [B, 4H], PyTorch gate order (i, f, g, o)

    i_g = jax.nn.sigmoid(gates[:, 0 * H:1 * H])
    f_g = jax.nn.sigmoid(gates[:, 1 * H:2 * H])
    g_g = jnp.tanh(gates[:, 2 * H:3 * H])
    o_g = jax.nn.sigmoid(gates[:, 3 * H:4 * H])

    c = c_ref[...]
    c_new = f_g * c + i_g * g_g
    h_new = o_g * jnp.tanh(c_new)

    # --- output projection (fc_out) -------------------------------------------
    pred = (jnp.dot(h_new, w_out_ref[...], preferred_element_type=jnp.float32)
            + b_out_ref[...])

    pred_ref[...] = pred.astype(pred_ref.dtype)
    h_out_ref[...] = h_new.astype(h_out_ref.dtype)
    c_out_ref[...] = c_new.astype(c_out_ref.dtype)


def decoder_forward(tokens, hidden, cell, params):
    """Mirror of Decoder.forward.

    tokens: [B] int32 token ids
    hidden: [1, B, H] float32   (num_layers=1 leading dim)
    cell:   [1, B, H] float32
    returns (prediction [B, O], hidden [1, B, H])   — same API as the PyTorch module.
    """
    emb_table = params["embedding"]          # [V, E]
    w_gates = params["w_gates"]              # [E+H, 4H]
    b_gates = params["b_gates"]              # [1, 4H]
    w_out_t = params["w_out_t"]              # [H, O]
    b_out = params["b_out"]                  # [1, O]

    B = tokens.shape[0]
    E = emb_table.shape[1]
    H = hidden.shape[-1]
    O = w_out_t.shape[-1]

    h0 = hidden[0]                           # [B, H]
    c0 = cell[0]                             # [B, H]

    vmem = pl.BlockSpec(memory_space=pltpu.MemorySpace.VMEM)
    smem = pl.BlockSpec(memory_space=pltpu.MemorySpace.SMEM)

    pred, h_new, _c_new = pl.pallas_call(
        _decoder_step_kernel,
        out_shape=(
            jax.ShapeDtypeStruct((B, O), jnp.float32),   # prediction
            jax.ShapeDtypeStruct((B, H), jnp.float32),   # new hidden
            jax.ShapeDtypeStruct((B, H), jnp.float32),   # new cell
        ),
        in_specs=[smem,            # tokens (int32 scalars)
                  vmem,            # embedding table
                  vmem, vmem,      # h0, c0
                  vmem, vmem,      # w_gates, b_gates
                  vmem, vmem],     # w_out_t, b_out
        out_specs=(vmem, vmem, vmem),
        scratch_shapes=[pltpu.VMEM((B, E + H), jnp.float32)],
        # P8: write the recurrent state back into the caller's buffers
        # (input index -> output index; indices count the positional inputs).
        input_output_aliases={2: 1, 3: 2},
    )(tokens.astype(jnp.int32), emb_table, h0, c0, w_gates, b_gates, w_out_t, b_out)

    # The PyTorch module returns only (prediction, hidden); the updated cell
    # state lives in the aliased buffer (third pallas output) for decode loops.
    return pred, h_new[None, :, :]


def _reference_forward(tokens, hidden, cell, params):
    """Pure-JAX reference (same math, no Pallas) for correctness checking."""
    emb = jnp.take(params["embedding"], tokens, axis=0)
    h, c = hidden[0], cell[0]
    xh = jnp.concatenate([emb, h], axis=-1)
    gates = xh @ params["w_gates"] + params["b_gates"]
    H = h.shape[-1]
    i_g = jax.nn.sigmoid(gates[:, 0 * H:1 * H])
    f_g = jax.nn.sigmoid(gates[:, 1 * H:2 * H])
    g_g = jnp.tanh(gates[:, 2 * H:3 * H])
    o_g = jax.nn.sigmoid(gates[:, 3 * H:4 * H])
    c_new = f_g * c + i_g * g_g
    h_new = o_g * jnp.tanh(c_new)
    pred = h_new @ params["w_out_t"] + params["b_out"]
    return pred, h_new[None, :, :]


def init_params(key, output_dim, emb_dim, hid_dim):
    ks = jax.random.split(key, 7)
    scale = 1.0 / jnp.sqrt(hid_dim)
    # torch stores W_ih as [4H, E] and W_hh as [4H, H]; we keep them transposed
    # and stacked into a single [(E+H), 4H] gate weight for the fused matmul.
    w_ih_t = jax.random.uniform(ks[1], (emb_dim, 4 * hid_dim), jnp.float32, -scale, scale)
    w_hh_t = jax.random.uniform(ks[2], (hid_dim, 4 * hid_dim), jnp.float32, -scale, scale)
    return {
        "embedding": jax.random.normal(ks[0], (output_dim, emb_dim), jnp.float32),
        "w_gates": jnp.concatenate([w_ih_t, w_hh_t], axis=0),
        # b_ih + b_hh folded into one bias row.
        "b_gates": (jax.random.uniform(ks[3], (1, 4 * hid_dim), jnp.float32, -scale, scale)
                    + jax.random.uniform(ks[4], (1, 4 * hid_dim), jnp.float32, -scale, scale)),
        "w_out_t": jax.random.uniform(ks[5], (hid_dim, output_dim), jnp.float32, -scale, scale),
        "b_out": jax.random.uniform(ks[6], (1, output_dim), jnp.float32, -scale, scale),
    }


if __name__ == "__main__":
    OUTPUT_DIM = 16   # vocab size (== output_dim of fc_out)
    EMB_DIM = 32
    HID_DIM = 32      # 4H = 128 -> lane-dense gate matmul
    BATCH = 8

    key = jax.random.PRNGKey(0)
    k_par, k_tok, k_h, k_c = jax.random.split(key, 4)

    params = init_params(k_par, OUTPUT_DIM, EMB_DIM, HID_DIM)
    tokens = jax.random.randint(k_tok, (BATCH,), 0, OUTPUT_DIM, jnp.int32)
    hidden = jax.random.normal(k_h, (1, BATCH, HID_DIM), jnp.float32)
    cell = jax.random.normal(k_c, (1, BATCH, HID_DIM), jnp.float32)

    # Reference first (state buffers are aliased by the kernel call).
    ref_pred, ref_hidden = _reference_forward(tokens, hidden, cell, params)

    pred, new_hidden = decoder_forward(tokens, hidden, cell, params)
    jax.block_until_ready((pred, new_hidden))

    assert pred.shape == (BATCH, OUTPUT_DIM)
    assert new_hidden.shape == (1, BATCH, HID_DIM)
    assert jnp.allclose(pred, ref_pred, atol=1e-5, rtol=1e-5)
    assert jnp.allclose(new_hidden, ref_hidden, atol=1e-5, rtol=1e-5)

    print("KERNEL_OK")
</pallas_src>

<mosaic_0001>
module attributes {stable_mosaic.version = 11 : i64} {
  func.func @_decoder_step_kernel(%arg0: memref<8xi32, #tpu.memory_space<smem>>, %arg1: memref<16x32xf32, #tpu.memory_space<vmem>>, %arg2: memref<8x32xf32, #tpu.memory_space<vmem>>, %arg3: memref<8x32xf32, #tpu.memory_space<vmem>>, %arg4: memref<64x128xf32, #tpu.memory_space<vmem>>, %arg5: memref<1x128xf32, #tpu.memory_space<vmem>>, %arg6: memref<32x16xf32, #tpu.memory_space<vmem>>, %arg7: memref<1x16xf32, #tpu.memory_space<vmem>>, %arg8: memref<8x16xf32, #tpu.memory_space<vmem>>, %arg9: memref<8x32xf32, #tpu.memory_space<vmem>>, %arg10: memref<8x32xf32, #tpu.memory_space<vmem>>, %arg11: memref<8x64xf32, #tpu.memory_space<vmem>>) attributes {dimension_semantics = [], scalar_prefetch = 0 : i64, scratch_operands = 1 : i64, tpu.core_type = #tpu.core_type<tc>} {
    %c0 = arith.constant 0 : index
    %0 = memref.load %arg0[%c0] : memref<8xi32, #tpu.memory_space<smem>>
    %1 = arith.index_cast %0 : i32 to index
    %c0_0 = arith.constant 0 : index
    %2 = vector.load %arg1[%1, %c0_0] : memref<16x32xf32, #tpu.memory_space<vmem>>, vector<1x32xf32>
    %c0_1 = arith.constant 0 : index
    %c0_2 = arith.constant 0 : index
    %3 = vector.load %arg11[%c0_1, %c0_2] : memref<8x64xf32, #tpu.memory_space<vmem>>, vector<1x32xf32>
    tpu.vector_store %arg11[%c0_1, %c0_2], %2 {strides = array<i32>} : memref<8x64xf32, #tpu.memory_space<vmem>>, vector<1x32xf32>,
    %c1 = arith.constant 1 : index
    %4 = memref.load %arg0[%c1] : memref<8xi32, #tpu.memory_space<smem>>
    %5 = arith.index_cast %4 : i32 to index
    %c0_3 = arith.constant 0 : index
    %6 = vector.load %arg1[%5, %c0_3] : memref<16x32xf32, #tpu.memory_space<vmem>>, vector<1x32xf32>
    %c1_4 = arith.constant 1 : index
    %c0_5 = arith.constant 0 : index
    %7 = vector.load %arg11[%c1_4, %c0_5] : memref<8x64xf32, #tpu.memory_space<vmem>>, vector<1x32xf32>
    tpu.vector_store %arg11[%c1_4, %c0_5], %6 {strides = array<i32>} : memref<8x64xf32, #tpu.memory_space<vmem>>, vector<1x32xf32>,
    %c2 = arith.constant 2 : index
    %8 = memref.load %arg0[%c2] : memref<8xi32, #tpu.memory_space<smem>>
    %9 = arith.index_cast %8 : i32 to index
    %c0_6 = arith.constant 0 : index
    %10 = vector.load %arg1[%9, %c0_6] : memref<16x32xf32, #tpu.memory_space<vmem>>, vector<1x32xf32>
    %c2_7 = arith.constant 2 : index
    %c0_8 = arith.constant 0 : index
    %11 = vector.load %arg11[%c2_7, %c0_8] : memref<8x64xf32, #tpu.memory_space<vmem>>, vector<1x32xf32>
    tpu.vector_store %arg11[%c2_7, %c0_8], %10 {strides = array<i32>} : memref<8x64xf32, #tpu.memory_space<vmem>>, vector<1x32xf32>,
    %c3 = arith.constant 3 : index
    %12 = memref.load %arg0[%c3] : memref<8xi32, #tpu.memory_space<smem>>
    %13 = arith.index_cast %12 : i32 to index
    %c0_9 = arith.constant 0 : index
    %14 = vector.load %arg1[%13, %c0_9] : memref<16x32xf32, #tpu.memory_space<vmem>>, vector<1x32xf32>
    %c3_10 = arith.constant 3 : index
    %c0_11 = arith.constant 0 : index
    %15 = vector.load %arg11[%c3_10, %c0_11] : memref<8x64xf32, #tpu.memory_space<vmem>>, vector<1x32xf32>
    tpu.vector_store %arg11[%c3_10, %c0_11], %14 {strides = array<i32>} : memref<8x64xf32, #tpu.memory_space<vmem>>, vector<1x32xf32>,
    %c4 = arith.constant 4 : index
    %16 = memref.load %arg0[%c4] : memref<8xi32, #tpu.memory_space<smem>>
    %17 = arith.index_cast %16 : i32 to index
    %c0_12 = arith.constant 0 : index
    %18 = vector.load %arg1[%17, %c0_12] : memref<16x32xf32, #tpu.memory_space<vmem>>, vector<1x32xf32>
    %c4_13 = arith.constant 4 : index
    %c0_14 = arith.constant 0 : index
    %19 = vector.load %arg11[%c4_13, %c0_14] : memref<8x64xf32, #tpu.memory_space<vmem>>, vector<1x32xf32>
    tpu.vector_store %arg11[%c4_13, %c0_14], %18 {strides = array<i32>} : memref<8x64xf32, #tpu.memory_space<vmem>>, vector<1x32xf32>,
    %c5 = arith.constant 5 : index
    %20 = memref.load %arg0[%c5] : memref<8xi32, #tpu.memory_space<smem>>
    %21 = arith.index_cast %20 : i32 to index
    %c0_15 = arith.constant 0 : index
    %22 = vector.load %arg1[%21, %c0_15] : memref<16x32xf32, #tpu.memory_space<vmem>>, vector<1x32xf32>
    %c5_16 = arith.constant 5 : index
    %c0_17 = arith.constant 0 : index
    %23 = vector.load %arg11[%c5_16, %c0_17] : memref<8x64xf32, #tpu.memory_space<vmem>>, vector<1x32xf32>
    tpu.vector_store %arg11[%c5_16, %c0_17], %22 {strides = array<i32>} : memref<8x64xf32, #tpu.memory_space<vmem>>, vector<1x32xf32>,
    %c6 = arith.constant 6 : index
    %24 = memref.load %arg0[%c6] : memref<8xi32, #tpu.memory_space<smem>>
    %25 = arith.index_cast %24 : i32 to index
    %c0_18 = arith.constant 0 : index
    %26 = vector.load %arg1[%25, %c0_18] : memref<16x32xf32, #tpu.memory_space<vmem>>, vector<1x32xf32>
    %c6_19 = arith.constant 6 : index
    %c0_20 = arith.constant 0 : index
    %27 = vector.load %arg11[%c6_19, %c0_20] : memref<8x64xf32, #tpu.memory_space<vmem>>, vector<1x32xf32>
    tpu.vector_store %arg11[%c6_19, %c0_20], %26 {strides = array<i32>} : memref<8x64xf32, #tpu.memory_space<vmem>>, vector<1x32xf32>,
    %c7 = arith.constant 7 : index
    %28 = memref.load %arg0[%c7] : memref<8xi32, #tpu.memory_space<smem>>
    %29 = arith.index_cast %28 : i32 to index
    %c0_21 = arith.constant 0 : index
    %30 = vector.load %arg1[%29, %c0_21] : memref<16x32xf32, #tpu.memory_space<vmem>>, vector<1x32xf32>
    %c7_22 = arith.constant 7 : index
    %c0_23 = arith.constant 0 : index
    %31 = vector.load %arg11[%c7_22, %c0_23] : memref<8x64xf32, #tpu.memory_space<vmem>>, vector<1x32xf32>
    tpu.vector_store %arg11[%c7_22, %c0_23], %30 {strides = array<i32>} : memref<8x64xf32, #tpu.memory_space<vmem>>, vector<1x32xf32>,
    %c0_24 = arith.constant 0 : index
    %c0_25 = arith.constant 0 : index
    %32 = vector.load %arg2[%c0_24, %c0_25] : memref<8x32xf32, #tpu.memory_space<vmem>>, vector<8x32xf32>
    %c0_26 = arith.constant 0 : index
    %c32 = arith.constant 32 : index
    %33 = vector.load %arg11[%c0_26, %c32] : memref<8x64xf32, #tpu.memory_space<vmem>>, vector<8x32xf32>
    tpu.vector_store %arg11[%c0_26, %c32], %32 {strides = array<i32>} : memref<8x64xf32, #tpu.memory_space<vmem>>, vector<8x32xf32>,
    %c0_27 = arith.constant 0 : index
    %c0_28 = arith.constant 0 : index
    %34 = vector.load %arg11[%c0_27, %c0_28] : memref<8x64xf32, #tpu.memory_space<vmem>>, vector<8x64xf32>
    %c0_29 = arith.constant 0 : index
    %c0_30 = arith.constant 0 : index
    %35 = vector.load %arg4[%c0_29, %c0_30] : memref<64x128xf32, #tpu.memory_space<vmem>>, vector<64x128xf32>
    %cst = arith.constant dense<0.000000e+00> : vector<8x128xf32>
    %36 = tpu.matmul %34, %35, %cst {dimension_numbers = #tpu.dot_dimension_numbers<[1], [0], [0], [1], [0, 0, 1, 1], [], []>} : vector<8x64xf32>, vector<64x128xf32>, vector<8x128xf32> -> vector<8x128xf32>
    %c0_31 = arith.constant 0 : index
    %c0_32 = arith.constant 0 : index
    %37 = vector.load %arg5[%c0_31, %c0_32] : memref<1x128xf32, #tpu.memory_space<vmem>>, vector<1x128xf32>
    %38 = vector.broadcast %37 : vector<1x128xf32> to vector<8x128xf32>
    %39 = arith.addf %36, %38 : vector<8x128xf32>
    %40 = vector.extract_strided_slice %39 {offsets = [0, 0], sizes = [8, 32], strides = [1, 1]} : vector<8x128xf32> to vector<8x32xf32>
    %41 = arith.negf %40 : vector<8x32xf32>
    %42 = math.exp %41 : vector<8x32xf32>
    %cst_33 = arith.constant 1.000000e+00 : f32
    %43 = vector.broadcast %cst_33 : f32 to vector<8x32xf32>
    %44 = arith.addf %43, %42 : vector<8x32xf32>
    %45 = arith.divf %43, %44 : vector<8x32xf32>
    %46 = vector.extract_strided_slice %39 {offsets = [0, 32], sizes = [8, 32], strides = [1, 1]} : vector<8x128xf32> to vector<8x32xf32>
    %47 = arith.negf %46 : vector<8x32xf32>
    %48 = math.exp %47 : vector<8x32xf32>
    %cst_34 = arith.constant 1.000000e+00 : f32
    %49 = vector.broadcast %cst_34 : f32 to vector<8x32xf32>
    %50 = arith.addf %49, %48 : vector<8x32xf32>
    %51 = arith.divf %49, %50 : vector<8x32xf32>
    %52 = vector.extract_strided_slice %39 {offsets = [0, 64], sizes = [8, 32], strides = [1, 1]} : vector<8x128xf32> to vector<8x32xf32>
    %53 = math.tanh %52 : vector<8x32xf32>
    %54 = vector.extract_strided_slice %39 {offsets = [0, 96], sizes = [8, 32], strides = [1, 1]} : vector<8x128xf32> to vector<8x32xf32>
    %55 = arith.negf %54 : vector<8x32xf32>
    %56 = math.exp %55 : vector<8x32xf32>
    %cst_35 = arith.constant 1.000000e+00 : f32
    %57 = vector.broadcast %cst_35 : f32 to vector<8x32xf32>
    %58 = arith.addf %57, %56 : vector<8x32xf32>
    %59 = arith.divf %57, %58 : vector<8x32xf32>
    %c0_36 = arith.constant 0 : index
    %c0_37 = arith.constant 0 : index
    %60 = vector.load %arg3[%c0_36, %c0_37] : memref<8x32xf32, #tpu.memory_space<vmem>>, vector<8x32xf32>
    %61 = arith.mulf %51, %60 : vector<8x32xf32>
    %62 = arith.mulf %45, %53 : vector<8x32xf32>
    %63 = arith.addf %61, %62 : vector<8x32xf32>
    %64 = math.tanh %63 : vector<8x32xf32>
    %65 = arith.mulf %59, %64 : vector<8x32xf32>
    %c0_38 = arith.constant 0 : index
    %c0_39 = arith.constant 0 : index
    %66 = vector.load %arg6[%c0_38, %c0_39] : memref<32x16xf32, #tpu.memory_space<vmem>>, vector<32x16xf32>
    %cst_40 = arith.constant dense<0.000000e+00> : vector<8x16xf32>
    %67 = tpu.matmul %65, %66, %cst_40 {dimension_numbers = #tpu.dot_dimension_numbers<[1], [0], [0], [1], [0, 0, 1, 1], [], []>} : vector<8x32xf32>, vector<32x16xf32>, vector<8x16xf32> -> vector<8x16xf32>
    %c0_41 = arith.constant 0 : index
    %c0_42 = arith.constant 0 : index
    %68 = vector.load %arg7[%c0_41, %c0_42] : memref<1x16xf32, #tpu.memory_space<vmem>>, vector<1x16xf32>
    %69 = vector.broadcast %68 : vector<1x16xf32> to vector<8x16xf32>
    %70 = arith.addf %67, %69 : vector<8x16xf32>
    %c0_43 = arith.constant 0 : index
    %c0_44 = arith.constant 0 : index
    %71 = vector.load %arg8[%c0_43, %c0_44] : memref<8x16xf32, #tpu.memory_space<vmem>>, vector<8x16xf32>
    tpu.vector_store %arg8[%c0_43, %c0_44], %70 {strides = array<i32>} : memref<8x16xf32, #tpu.memory_space<vmem>>, vector<8x16xf32>,
    %c0_45 = arith.constant 0 : index
    %c0_46 = arith.constant 0 : index
    %72 = vector.load %arg9[%c0_45, %c0_46] : memref<8x32xf32, #tpu.memory_space<vmem>>, vector<8x32xf32>
    tpu.vector_store %arg9[%c0_45, %c0_46], %65 {strides = array<i32>} : memref<8x32xf32, #tpu.memory_space<vmem>>, vector<8x32xf32>,
    %c0_47 = arith.constant 0 : index
    %c0_48 = arith.constant 0 : index
    %73 = vector.load %arg10[%c0_47, %c0_48] : memref<8x32xf32, #tpu.memory_space<vmem>>, vector<8x32xf32>
    tpu.vector_store %arg10[%c0_47, %c0_48], %63 {strides = array<i32>} : memref<8x32xf32, #tpu.memory_space<vmem>>, vector<8x32xf32>,
    return
  }
}

</mosaic_0001>

<llo_original>
// kernel: tpu_custom_call.1
$region0: #{tpu_custom_call.1}
  #allocation0 [shape = 'u32[]', space=smem, size = 0x4, offset = 0x4, fixed_abs, tag = 'smem constant byte address 0x4 - core index']
  #allocation1 [shape = 'u32[144,128]{1,0:T(1,128)}', space=vmem, size = 0x12000, scoped, tag = 'internal scratch']
  #allocation2 [shape = 'f32[8,64]{1,0:T(8,128)}', space=vmem, size = 0x1000, scoped, tag = 'scratch operand']
  %s0 = inlined_call_operand.vmem [shape: s32[8], index: 0, kind: input, shape index: {}]
  %s1 = inlined_call_operand.vmem [shape: f32[16,32], index: 1, kind: input, shape index: {}]
  %s2 = inlined_call_operand.hbm [shape: f32[8,32], index: 2, kind: input, shape index: {}, may-alias: {2,9}]
  %s3 = inlined_call_operand.hbm [shape: f32[8,32], index: 3, kind: input, shape index: {}, may-alias: {3,10}]
  %s4 = inlined_call_operand.vmem [shape: f32[64,128], index: 4, kind: input, shape index: {}]
  %s5 = inlined_call_operand.vmem [shape: f32[1,128], index: 5, kind: input, shape index: {}]
  %s6 = inlined_call_operand.vmem [shape: f32[32,16], index: 6, kind: input, shape index: {}]
  %s7 = inlined_call_operand.hbm [shape: f32[1,16], index: 7, kind: input, shape index: {}]
  %s8 = inlined_call_operand.hbm [shape: f32[8,16], index: 8, kind: output, shape index: {0}]
  %s9 = inlined_call_operand.hbm [shape: f32[8,32], index: 9, kind: output, shape index: {1}, may-alias: {2,9}]
  %s10 = inlined_call_operand.hbm [shape: f32[8,32], index: 10, kind: output, shape index: {2}, may-alias: {3,10}]
  %11 = xla_tuple %s8, %s9, %s10
  %s12 = sld [smem:[#allocation0]]
  $region74: #{tpu_custom_call.1} parent=0
    _
  %s14 = ssub.s32 1, %s12
  %s15 = scalar_select 0, %s14, %s12
  $region1: #{tpu_custom_call.1} parent=0
    #allocation3 [shape = 'u8[512]{0}', space=smem, size = 0x200, scoped, tag = 'input window, operand 0, single buffered']
    #allocation4 [shape = 's32[1]{0}', space=sflag, size = 0x4, scoped, tag = 'scoped memory for tpu_custom_call.1']
    #allocation5 [shape = 's32[1]{0}', space=sflag, size = 0x4, scoped, tag = 'scoped memory for tpu_custom_call.1']
    #allocation6 [shape = 's32[1]{0}', space=sflag, size = 0x4, scoped, tag = 'scoped memory for tpu_custom_call.1']
    #allocation7 [shape = 'u8[4096]{0}', space=vmem, size = 0x1000, scoped, tag = 'input window, operand 2, single buffered']
    #allocation8 [shape = 'u8[4096]{0}', space=vmem, size = 0x1000, scoped, tag = 'input window, operand 3, single buffered']
    #allocation9 [shape = 's32[1]{0}', space=sflag, size = 0x4, scoped, tag = 'scoped memory for tpu_custom_call.1']
    #allocation10 [shape = 'u8[512]{0}', space=vmem, size = 0x400, scoped, tag = 'input window, operand 7, single buffered']
    #allocation11 [shape = 'u8[4096]{0}', space=vmem, size = 0x1000, scoped, tag = 'output window, operand 0, single buffered']
    #allocation12 [shape = 'u8[4096]{0}', space=vmem, size = 0x1000, scoped, tag = 'output window, operand 1, single buffered']
    #allocation13 [shape = 's32[1]{0}', space=sflag, size = 0x4, scoped, tag = 'scoped memory for tpu_custom_call.1']
    #allocation14 [shape = 'u8[4096]{0}', space=vmem, size = 0x1000, scoped, tag = 'output window, operand 2, single buffered']
    %16 = vsyncpa [#allocation6], 0
    %17 = vsyncpa [#allocation4], 0
    %18 = vsyncpa [#allocation9], 0
    %19 = vsyncpa [#allocation5], 0
    %20 = vsyncpa [#allocation13], 0
    // Predicated region
    $region2: #{tpu_custom_call.1} parent=1 // pred_check
      _
    $region3: #{tpu_custom_call.1} parent=1 // pred_check_branch
      %22 = sbr.rel (0) target = $region5
    $region4: #{tpu_custom_call.1} parent=1 // pred_region
      %s24 = ssub.s32 16, 16
      %25 = vsyncadd [#allocation6], %s24
      %s27 = sshll.u32 %s0, 4
      %s28 = int_to_ptr.vmem [resolvable:$true] %s27
      %30 = dma.vmem_to_smem %s28, 16, [#allocation3], [#allocation6]
    $region5: #{tpu_custom_call.1} parent=1 // pred_fallthru
      _
    // Predicated region
    $region6: #{tpu_custom_call.1} parent=1 // pred_check
      _
    $region7: #{tpu_custom_call.1} parent=1 // pred_check_branch
      %32 = sbr.rel (0) target = $region9
    $region8: #{tpu_custom_call.1} parent=1 // pred_region
      _
    $region9: #{tpu_custom_call.1} parent=1 // pred_fallthru
      _
    // Predicated region
    $region10: #{tpu_custom_call.1} parent=1 // pred_check
      _
    $region11: #{tpu_custom_call.1} parent=1 // pred_check_branch
      %34 = sbr.rel (0) target = $region13
    $region12: #{tpu_custom_call.1} parent=1 // pred_region
      %s36 = ssub.s32 128, 128
      %37 = vsyncadd [#allocation4], %s36
      %s39 = sshll.u32 [#allocation7], 4
      %s40 = int_to_ptr.vmem [resolvable:$true] %s39
      %42 = dma.hbm_to_vmem [thread:$0]  %s2, 128, %s40, [#allocation4]
    $region13: #{tpu_custom_call.1} parent=1 // pred_fallthru
      _
    // Predicated region
    $region14: #{tpu_custom_call.1} parent=1 // pred_check
      _
    $region15: #{tpu_custom_call.1} parent=1 // pred_check_branch
      %44 = sbr.rel (0) target = $region17
    $region16: #{tpu_custom_call.1} parent=1 // pred_region
      %s46 = ssub.s32 128, 128
      %47 = vsyncadd [#allocation9], %s46
      %s49 = sshll.u32 [#allocation8], 4
      %s50 = int_to_ptr.vmem [resolvable:$true] %s49
      %52 = dma.hbm_to_vmem [thread:$0]  %s3, 128, %s50, [#allocation9]
    $region17: #{tpu_custom_call.1} parent=1 // pred_fallthru
      _
    // Predicated region
    $region18: #{tpu_custom_call.1} parent=1 // pred_check
      _
    $region19: #{tpu_custom_call.1} parent=1 // pred_check_branch
      %54 = sbr.rel (0) target = $region21
    $region20: #{tpu_custom_call.1} parent=1 // pred_region
      _
    $region21: #{tpu_custom_call.1} parent=1 // pred_fallthru
      _
    // Predicated region
    $region22: #{tpu_custom_call.1} parent=1 // pred_check
      _
    $region23: #{tpu_custom_call.1} parent=1 // pred_check_branch
      %56 = sbr.rel (0) target = $region25
    $region24: #{tpu_custom_call.1} parent=1 // pred_region
      _
    $region25: #{tpu_custom_call.1} parent=1 // pred_fallthru
      _
    // Predicated region
    $region26: #{tpu_custom_call.1} parent=1 // pred_check
      _
    $region27: #{tpu_custom_call.1} parent=1 // pred_check_branch
      %58 = sbr.rel (0) target = $region29
    $region28: #{tpu_custom_call.1} parent=1 // pred_region
      _
    $region29: #{tpu_custom_call.1} parent=1 // pred_fallthru
      _
    // Predicated region
    $region30: #{tpu_custom_call.1} parent=1 // pred_check
      _
    $region31: #{tpu_custom_call.1} parent=1 // pred_check_branch
      %60 = sbr.rel (0) target = $region33
    $region32: #{tpu_custom_call.1} parent=1 // pred_region
      %s62 = ssub.s32 16, 16
      %63 = vsyncadd [#allocation9], %s62
      %s65 = sshll.u32 [#allocation10], 4
      %s66 = int_to_ptr.vmem [resolvable:$true] %s65
      %68 = dma.hbm_to_vmem [thread:$0]  %s7, 16, %s66, [#allocation9]
    $region33: #{tpu_custom_call.1} parent=1 // pred_fallthru
      _
    // Predicated region
    $region34: #{tpu_custom_call.1} parent=1 // pred_check
      _
    $region35: #{tpu_custom_call.1} parent=1 // pred_check_branch
      %70 = sbr.rel (0) target = $region37
    $region36: #{tpu_custom_call.1} parent=1 // pred_region
      %71 = dma.done [#allocation6], 16
    $region37: #{tpu_custom_call.1} parent=1 // pred_fallthru
      _
    // Predicated region
    $region38: #{tpu_custom_call.1} parent=1 // pred_check
      _
    $region39: #{tpu_custom_call.1} parent=1 // pred_check_branch
      %73 = sbr.rel (0) target = $region41
    $region40: #{tpu_custom_call.1} parent=1 // pred_region
      %74 = dma.done [#allocation4], 128
    $region41: #{tpu_custom_call.1} parent=1 // pred_fallthru
      _
    // Predicated region
    $region42: #{tpu_custom_call.1} parent=1 // pred_check
      _
    $region43: #{tpu_custom_call.1} parent=1 // pred_check_branch
      %76 = sbr.rel (0) target = $region45
    $region44: #{tpu_custom_call.1} parent=1 // pred_region
      %77 = dma.done [#allocation9], 128
    $region45: #{tpu_custom_call.1} parent=1 // pred_fallthru
      _
    // Predicated region
    $region46: #{tpu_custom_call.1} parent=1 // pred_check
      _
    $region47: #{tpu_custom_call.1} parent=1 // pred_check_branch
      %79 = sbr.rel (0) target = $region49
    $region48: #{tpu_custom_call.1} parent=1 // pred_region
      %80 = dma.done [#allocation9], 16
    $region49: #{tpu_custom_call.1} parent=1 // pred_fallthru
      _
    %81 = sfence
    %s82 = sld [smem:[#allocation3]]
    %s83 = scalar_lea.vmem %s1, %s82
    %v84 = vld [vmem:[%s83] sm:$0x1]
    %vm85 = vcmask 253952
    %86 = vst.msk [vmem:[#allocation2] sm:$0x1] %vm85, %v84
    %s87 = sld [smem:[#allocation3 + $0x1]]
    %s88 = scalar_lea.vmem %s1, %s87
    %v89 = vld [vmem:[%s88] sm:$0x1]
    %90 = vst.msk [vmem:[#allocation2 + $0x1] sm:$0x1] %vm85, %v89
    %s91 = sld [smem:[#allocation3 + $0x2]]
    %s92 = scalar_lea.vmem %s1, %s91
    %v93 = vld [vmem:[%s92] sm:$0x1]
    %94 = vst.msk [vmem:[#allocation2 + $0x2] sm:$0x1] %vm85, %v93
    %s95 = sld [smem:[#allocation3 + $0x3]]
    %s96 = scalar_lea.vmem %s1, %s95
    %v97 = vld [vmem:[%s96] sm:$0x1]
    %98 = vst.msk [vmem:[#allocation2 + $0x3] sm:$0x1] %vm85, %v97
    %s99 = sld [smem:[#allocation3 + $0x4]]
    %s100 = scalar_lea.vmem %s1, %s99
    %v101 = vld [vmem:[%s100] sm:$0x1]
    %102 = vst.msk [vmem:[#allocation2 + $0x4] sm:$0x1] %vm85, %v101
    %s103 = sld [smem:[#allocation3 + $0x5]]
    %s104 = scalar_lea.vmem %s1, %s103
    %v105 = vld [vmem:[%s104] sm:$0x1]
    %106 = vst.msk [vmem:[#allocation2 + $0x5] sm:$0x1] %vm85, %v105
    %s107 = sld [smem:[#allocation3 + $0x6]]
    %s108 = scalar_lea.vmem %s1, %s107
    %v109 = vld [vmem:[%s108] sm:$0x1]
    %110 = vst.msk [vmem:[#allocation2 + $0x6] sm:$0x1] %vm85, %v109
    %s111 = sld [smem:[#allocation3 + $0x7]]
    %s112 = scalar_lea.vmem %s1, %s111
    %v113 = vld [vmem:[%s112] sm:$0x1]
    %114 = vst.msk [vmem:[#allocation2 + $0x7] sm:$0x1] %vm85, %v113
    %v115 = vld [vmem:[#allocation7] sm:$0xff]
    %117 = vrot.lane.b32.xlu0 %v115, 32
    %v118 = vpop.permute.xlu0 %117
    %vm120 = vcmask 523520
    %121 = vst.msk [vmem:[#allocation2] sm:$0xff] %vm120, %v118
    %v122 = vld [vmem:[#allocation2] sm:$0xff]
    %v123 = vld [vmem:[%s4] sm:$0xff]
    %v124 = vld [vmem:[%s4 + $0x8] sm:$0xff]
    %v125 = vld [vmem:[%s4 + $0x10] sm:$0xff]
    %v126 = vld [vmem:[%s4 + $0x18] sm:$0xff]
    %v127 = vld [vmem:[%s4 + $0x20] sm:$0xff]
    %v128 = vld [vmem:[%s4 + $0x28] sm:$0xff]
    %v129 = vld [vmem:[%s4 + $0x30] sm:$0xff]
    %v130 = vld [vmem:[%s4 + $0x38] sm:$0xff]
    %v131 = vld [vmem:[%s5] sm:$0x1]
    %v133 = vlaneseq
    %v134 = vshrl.u32 %v133, 7
    %v135 = vsub.s32 0, %v134
    %v136 = vrot.slane %v131, %v135
    %vm138 = vcmask 523264
    %v140 = vsel %vm138, %v122, 0
    %142 = vmatprep.subr.mxu0 0.0
    %143 = vmatpush1.msra.mxu0 %v123
    %144 = vmatprep.subr.mxu0 0.0
    %145 = vmatpush1.msra.mxu0 %v124
    %146 = vmatprep.subr.mxu0 0.0
    %147 = vmatpush1.msra.mxu0 %v125
    %148 = vmatprep.subr.mxu0 0.0
    %149 = vmatpush1.msra.mxu0 %v126
    %150 = vmatprep.subr.mxu0 0.0
    %151 = vmatpush1.msra.mxu0 %v127
    %152 = vmatprep.subr.mxu0 0.0
    %153 = vmatpush1.msra.mxu0 %v128
    %154 = vmatprep.subr.mxu0 0.0
    %155 = vmatpush1.msra.mxu0 %v129
    %156 = vmatprep.subr.mxu0 0.0
    %157 = vmatpush1.msra.mxu0 %v130
    %158 = vmatprep.subr.mxu0 0.0
    %159 = vmatpush1.msra.mxu0 0.0
    %160 = vmatprep.subr.mxu0 0.0
    %161 = vmatpush1.msra.mxu0 0.0
    %162 = vmatprep.subr.mxu0 0.0
    %163 = vmatpush1.msra.mxu0 0.0
    %164 = vmatprep.subr.mxu0 0.0
    %165 = vmatpush1.msra.mxu0 0.0
    %166 = vmatprep.subr.mxu0 0.0
    %167 = vmatpush1.msra.mxu0 0.0
    %168 = vmatprep.subr.mxu0 0.0
    %169 = vmatpush1.msra.mxu0 0.0
    %170 = vmatprep.subr.mxu0 0.0
    %171 = vmatpush1.msra.mxu0 0.0
    %172 = vmatprep.subr.mxu0 0.0
    %173 = vmatpush1.msra.mxu0 0.0
    %174 = vmatprep.subr.mxu0 0.0
    %175 = vmatpush1.msra.mxu0 0.0
    %176 = vmatprep.subr.mxu0 0.0
    %177 = vmatpush1.msra.mxu0 0.0
    %178 = vmatprep.subr.mxu0 0.0
    %179 = vmatpush1.msra.mxu0 0.0
    %180 = vmatprep.subr.mxu0 0.0
    %181 = vmatpush1.msra.mxu0 0.0
    %182 = vmatprep.subr.mxu0 0.0
    %183 = vmatpush1.msra.mxu0 0.0
    %184 = vmatprep.subr.mxu0 0.0
    %185 = vmatpush1.msra.mxu0 0.0
    %186 = vmatprep.subr.mxu0 0.0
    %187 = vmatpush1.msra.mxu0 0.0
    %188 = vmatprep.subr.mxu0 0.0
    %189 = vmatpush1.msra.mxu0 0.0
    %190 = vmatprep.subr.mxu0 0.0
    %191 = vmatpush1.msra.mxu0 0.0
    %192 = vmatprep.subr.mxu0 0.0
    %193 = vmatpush1.msra.mxu0 0.0
    %194 = vmatprep.subr.mxu0 0.0
    %195 = vmatpush1.msra.mxu0 0.0
    %196 = vmatprep.subr.mxu0 0.0
    %197 = vmatpush1.msra.mxu0 0.0
    %198 = vmatprep.subr.mxu0 0.0
    %199 = vmatpush1.msra.mxu0 0.0
    %200 = vmatprep.subr.mxu0 0.0
    %201 = vmatpush1.msra.mxu0 0.0
    %202 = vmatprep.subr.mxu0 0.0
    %203 = vmatpush1.msra.mxu0 0.0
    %204 = vmatprep.subr.mxu0 0.0
    %205 = vmatpush1.msra.mxu0 0.0
    %206 = vmatprep.mubr.f32.mxu0 0.0
    %207 = vmatmul.mubr.f32.gmra.mrb[0].mxu0 %v140
    %v208 = vpop.f32.mrb[0].mxu0
    %v209 = vadd.f32 %v136, %v208
    %v210 = vpop.f32.mrb[0].mxu0
    %211 = vdwg.mxu0
    %v212 = vxor.u32 %v209, 2147483648
    %v213 = vmul.f32 %v212, 1.442695
    %v214 = vpow.pop %v213
    %v215 = vadd.f32 %v214, 1.0
    %v216 = vrcp.pop %v215
    %v217 = vmul.f32 1.0, %v216
    %v218 = vtanh.pop %v209
    %v219 = vld [vmem:[#allocation8] sm:$0xff]
    %221 = vrot.lane.b32.xlu0 %v219, 32
    %v222 = vpop.permute.xlu0 %221
    %v224 = vmul.f32 %v217, %v222
    %226 = vrot.lane.b32.xlu0 %v218, 64
    %v227 = vpop.permute.xlu0 %226
    %v229 = vmul.f32 %v217, %v227
    %231 = vrot.lane.b32.xlu0 %v229, 32
    %v232 = vpop.permute.xlu0 %231
    %v234 = vadd.f32 %v224, %v232
    %v235 = vtanh.pop %v234
    %237 = vrot.lane.b32.xlu0 %v235, 64
    %v238 = vpop.permute.xlu0 %237
    %v240 = vmul.f32 %v217, %v238
    %v241 = vld [vmem:[%s6] sm:$0xff]
    %v242 = vld [vmem:[%s6 + $0x8] sm:$0xff]
    %v243 = vld [vmem:[%s6 + $0x10] sm:$0xff]
    %v244 = vld [vmem:[%s6 + $0x18] sm:$0xff]
    %v245 = vld [vmem:[#allocation10] sm:$0x1]
    %v247 = vlaneseq
    %v248 = vshrl.u32 %v247, 7
    %v249 = vsub.s32 0, %v248
    %v250 = vrot.slane %v245, %v249
    %253 = vrot.lane.b32.xlu0 %v240, 32
    %v254 = vpop.permute.xlu0 %253
    %vm255 = vcmask 261120
    %v256 = vsel %vm255, %v254, 0
    %258 = vmatprep.subr.mxu0 0.0
    %259 = vmatpush1.msra.mxu0 %v241
    %260 = vmatprep.subr.mxu0 0.0
    %261 = vmatpush1.msra.mxu0 %v242
    %262 = vmatprep.subr.mxu0 0.0
    %263 = vmatpush1.msra.mxu0 %v243
    %264 = vmatprep.subr.mxu0 0.0
    %265 = vmatpush1.msra.mxu0 %v244
    %266 = vmatprep.subr.mxu0 0.0
    %267 = vmatpush1.msra.mxu0 0.0
    %268 = vmatprep.subr.mxu0 0.0
    %269 = vmatpush1.msra.mxu0 0.0
    %270 = vmatprep.subr.mxu0 0.0
    %271 = vmatpush1.msra.mxu0 0.0
    %272 = vmatprep.subr.mxu0 0.0
    %273 = vmatpush1.msra.mxu0 0.0
    %274 = vmatprep.subr.mxu0 0.0
    %275 = vmatpush1.msra.mxu0 0.0
    %276 = vmatprep.subr.mxu0 0.0
    %277 = vmatpush1.msra.mxu0 0.0
    %278 = vmatprep.subr.mxu0 0.0
    %279 = vmatpush1.msra.mxu0 0.0
    %280 = vmatprep.subr.mxu0 0.0
    %281 = vmatpush1.msra.mxu0 0.0
    %282 = vmatprep.subr.mxu0 0.0
    %283 = vmatpush1.msra.mxu0 0.0
    %284 = vmatprep.subr.mxu0 0.0
    %285 = vmatpush1.msra.mxu0 0.0
    %286 = vmatprep.subr.mxu0 0.0
    %287 = vmatpush1.msra.mxu0 0.0
    %288 = vmatprep.subr.mxu0 0.0
    %289 = vmatpush1.msra.mxu0 0.0
    %290 = vmatprep.subr.mxu0 0.0
    %291 = vmatpush1.msra.mxu0 0.0
    %292 = vmatprep.subr.mxu0 0.0
    %293 = vmatpush1.msra.mxu0 0.0
    %294 = vmatprep.subr.mxu0 0.0
    %295 = vmatpush1.msra.mxu0 0.0
    %296 = vmatprep.subr.mxu0 0.0
    %297 = vmatpush1.msra.mxu0 0.0
    %298 = vmatprep.subr.mxu0 0.0
    %299 = vmatpush1.msra.mxu0 0.0
    %300 = vmatprep.subr.mxu0 0.0
    %301 = vmatpush1.msra.mxu0 0.0
    %302 = vmatprep.subr.mxu0 0.0
    %303 = vmatpush1.msra.mxu0 0.0
    %304 = vmatprep.subr.mxu0 0.0
    %305 = vmatpush1.msra.mxu0 0.0
    %306 = vmatprep.subr.mxu0 0.0
    %307 = vmatpush1.msra.mxu0 0.0
    %308 = vmatprep.subr.mxu0 0.0
    %309 = vmatpush1.msra.mxu0 0.0
    %310 = vmatprep.subr.mxu0 0.0
    %311 = vmatpush1.msra.mxu0 0.0
    %312 = vmatprep.subr.mxu0 0.0
    %313 = vmatpush1.msra.mxu0 0.0
    %314 = vmatprep.subr.mxu0 0.0
    %315 = vmatpush1.msra.mxu0 0.0
    %316 = vmatprep.subr.mxu0 0.0
    %317 = vmatpush1.msra.mxu0 0.0
    %318 = vmatprep.subr.mxu0 0.0
    %319 = vmatpush1.msra.mxu0 0.0
    %320 = vmatprep.subr.mxu0 0.0
    %321 = vmatpush1.msra.mxu0 0.0
    %322 = vmatprep.mubr.f32.mxu0 0.0
    %323 = vmatmul.mubr.f32.gmra.mrb[0].mxu0 %v256
    %v324 = vpop.f32.mrb[0].mxu0
    %v325 = vadd.f32 %v250, %v324
    %v326 = vpop.f32.mrb[0].mxu0
    %327 = vdwg.mxu0
    %vm328 = vcmask 130048
    %329 = vst.msk [vmem:[#allocation11] sm:$0xff] %vm328, %v325
    %331 = vst.msk [vmem:[#allocation12] sm:$0xff] %vm255, %v254
    %333 = vrot.lane.b32.xlu0 %v234, 96
    %v334 = vpop.permute.xlu0 %333
    %336 = vst.msk [vmem:[#allocation14] sm:$0xff] %vm255, %v334
    // Predicated region
    $region50: #{tpu_custom_call.1} parent=1 // pred_check
      _
    $region51: #{tpu_custom_call.1} parent=1 // pred_check_branch
      %338 = sbr.rel (0) target = $region53
    $region52: #{tpu_custom_call.1} parent=1 // pred_region
      %s340 = ssub.s32 128, 128
      %341 = vsyncadd [#allocation5], %s340
      %s343 = sshll.u32 [#allocation11], 4
      %s344 = int_to_ptr.vmem [resolvable:$true] %s343
      %346 = dma.vmem_to_hbm [thread:$0]  %s344, 128, %s8, [#allocation5]
    $region53: #{tpu_custom_call.1} parent=1 // pred_fallthru
      _
    // Predicated region
    $region54: #{tpu_custom_call.1} parent=1 // pred_check
      _
    $region55: #{tpu_custom_call.1} parent=1 // pred_check_branch
      %348 = sbr.rel (0) target = $region57
    $region56: #{tpu_custom_call.1} parent=1 // pred_region
      %s350 = ssub.s32 128, 128
      %351 = vsyncadd [#allocation13], %s350
      %s353 = sshll.u32 [#allocation12], 4
      %s354 = int_to_ptr.vmem [resolvable:$true] %s353
      %356 = dma.vmem_to_hbm [thread:$0]  %s354, 128, %s9, [#allocation13]
    $region57: #{tpu_custom_call.1} parent=1 // pred_fallthru
      _
    // Predicated region
    $region58: #{tpu_custom_call.1} parent=1 // pred_check
      _
    $region59: #{tpu_custom_call.1} parent=1 // pred_check_branch
      %358 = sbr.rel (0) target = $region61
    $region60: #{tpu_custom_call.1} parent=1 // pred_region
      %s360 = ssub.s32 128, 128
      %361 = vsyncadd [#allocation13], %s360
      %s363 = sshll.u32 [#allocation14], 4
      %s364 = int_to_ptr.vmem [resolvable:$true] %s363
      %366 = dma.vmem_to_hbm [thread:$0]  %s364, 128, %s10, [#allocation13]
    $region61: #{tpu_custom_call.1} parent=1 // pred_fallthru
      _
    // Predicated region
    $region62: #{tpu_custom_call.1} parent=1 // pred_check
      _
    $region63: #{tpu_custom_call.1} parent=1 // pred_check_branch
      %368 = sbr.rel (0) target = $region65
    $region64: #{tpu_custom_call.1} parent=1 // pred_region
      %369 = dma.done [#allocation5], 128
    $region65: #{tpu_custom_call.1} parent=1 // pred_fallthru
      _
    // Predicated region
    $region66: #{tpu_custom_call.1} parent=1 // pred_check
      _
    $region67: #{tpu_custom_call.1} parent=1 // pred_check_branch
      %371 = sbr.rel (0) target = $region69
    $region68: #{tpu_custom_call.1} parent=1 // pred_region
      %372 = dma.done [#allocation13], 128
    $region69: #{tpu_custom_call.1} parent=1 // pred_fallthru
      _
    // Predicated region
    $region70: #{tpu_custom_call.1} parent=1 // pred_check
      _
    $region71: #{tpu_custom_call.1} parent=1 // pred_check_branch
      %374 = sbr.rel (0) target = $region73
    $region72: #{tpu_custom_call.1} parent=1 // pred_region
      %375 = dma.done [#allocation13], 128
    $region73: #{tpu_custom_call.1} parent=1 // pred_fallthru
      _
    %376 = vsyncpa [#allocation4], 1
    %377 = vsyncpa [#allocation9], 1
    %378 = vsyncpa [#allocation5], 1
    %379 = vsyncpa [#allocation13], 1
    %380 = vsyncpa [#allocation6], 1

</llo_original>
